<compile_context>
chip_gen: v5e
topology: v5e:2x2
jax: 0.10.0
libtpu: 0.0.40
codegen_flags: <defaults>
</compile_context>

<pallas_src>
import jax
import jax.numpy as jnp
from jax import lax
from jax.experimental import pallas as pl
from jax.experimental.pallas import tpu as pltpu

KH = KW = 3
PAD = 1
EPS = 1e-5
DROP_P = 0.1


def stdconv_kernel(p_ref, w_ref, b_ref, g_ref, be_ref, u_ref, o_ref):
    # p_ref : (KH*KW*Cin, N*H*W)  im2col patches, taps-on-sublanes / spatial-on-lanes
    # w_ref : (Cout, KH*KW*Cin)   folded conv weight
    # b_ref : (Cout, 1)           conv bias
    # g_ref : (Cout, 1)           BN gamma * 1/(1-p)   (dropout scale pre-folded)
    # be_ref: (Cout, 1)           BN beta  * 1/(1-p)
    # u_ref : (Cout, N*H*W)       uniform [0,1) dropout field
    # o_ref : (Cout, N*H*W)

    # --- Conv2d (3x3, stride 1, pad 1) as a single MXU matmul -> (Cout, N*H*W) ---
    y = jnp.dot(w_ref[...], p_ref[...], preferred_element_type=jnp.float32)

    # --- bias + ReLU (activation is applied BEFORE BN, matching StdConv.forward) ---
    y = jnp.maximum(y + b_ref[...], 0.0)

    # --- BatchNorm2d (training): one-pass per-channel stats over N*H*W (lane reduce) ---
    inv_m = jnp.float32(1.0 / y.shape[1])
    s1 = jnp.sum(y, axis=1, keepdims=True)            # (Cout, 1)
    s2 = jnp.sum(y * y, axis=1, keepdims=True)        # (Cout, 1)
    mean = s1 * inv_m
    var = jnp.maximum(s2 * inv_m - mean * mean, 0.0)  # biased variance
    scale = lax.rsqrt(var + EPS) * g_ref[...]          # gamma/(1-p) folded in
    shift = be_ref[...] - mean * scale                 # beta /(1-p) folded in
    y = y * scale + shift                              # single FMA sweep on the big tensor

    # --- Dropout(p): select only; scale already folded into gamma/beta ---
    o_ref[...] = jnp.where(u_ref[...] >= jnp.float32(DROP_P), y, 0.0).astype(o_ref.dtype)


def std_conv(x_nchw, weight_oihw, bias, gamma, beta, seed=0):
    N, Cin, H, W = x_nchw.shape
    Cout = weight_oihw.shape[0]
    NHW = N * H * W
    K = KH * KW * Cin

    # ---- layout glue (outside the hot path) ----
    x_nhwc = jnp.transpose(x_nchw, (0, 2, 3, 1)).astype(jnp.float32)
    x_pad = jnp.pad(x_nhwc, ((0, 0), (PAD, PAD), (PAD, PAD), (0, 0)))

    # im2col: rows ordered (ky, kx, cin), columns ordered (n, h, w)
    taps = [x_pad[:, ky:ky + H, kx:kx + W, :] for ky in range(KH) for kx in range(KW)]
    patches = jnp.stack(taps, axis=0)                       # (KH*KW, N, H, W, Cin)
    patches_t = jnp.transpose(patches, (0, 4, 1, 2, 3)).reshape(K, NHW)

    # weight folded to (Cout, KH*KW*Cin) with matching (ky, kx, cin) ordering
    w_fold = jnp.transpose(weight_oihw, (0, 2, 3, 1)).reshape(Cout, K).astype(jnp.float32)

    b2 = bias.reshape(Cout, 1).astype(jnp.float32)
    keep_scale = 1.0 / (1.0 - DROP_P)
    g2 = (gamma * keep_scale).reshape(Cout, 1).astype(jnp.float32)
    be2 = (beta * keep_scale).reshape(Cout, 1).astype(jnp.float32)

    # uniform dropout field in the lane-dense (Cout, N*H*W) layout
    u = jax.random.uniform(jax.random.PRNGKey(seed), (Cout, NHW), jnp.float32)

    cost = pl.CostEstimate(
        flops=2 * NHW * Cout * K,
        transcendentals=Cout,
        bytes_accessed=4 * (K * NHW + Cout * K + 3 * Cout + 2 * Cout * NHW),
    )

    out_flat = pl.pallas_call(
        stdconv_kernel,
        out_shape=jax.ShapeDtypeStruct((Cout, NHW), jnp.float32),
        grid=(1,),
        in_specs=[
            pl.BlockSpec((K, NHW), lambda i: (0, 0)),
            pl.BlockSpec((Cout, K), lambda i: (0, 0)),
            pl.BlockSpec((Cout, 1), lambda i: (0, 0)),
            pl.BlockSpec((Cout, 1), lambda i: (0, 0)),
            pl.BlockSpec((Cout, 1), lambda i: (0, 0)),
            pl.BlockSpec((Cout, NHW), lambda i: (0, 0)),
        ],
        out_specs=pl.BlockSpec((Cout, NHW), lambda i: (0, 0)),
        compiler_params=pltpu.CompilerParams(
            dimension_semantics=("arbitrary",),
            vmem_limit_bytes=32 * 1024 * 1024,
        ),
        cost_estimate=cost,
    )(patches_t, w_fold, b2, g2, be2, u)

    # (Cout, N*H*W) -> (N, Cout, H, W)
    return jnp.transpose(out_flat.reshape(Cout, N, H, W), (1, 0, 2, 3))


if __name__ == "__main__":
    # small shapes consistent with the module: nin=4, nout=8, 16x16 spatial, batch=2
    N, CIN, COUT, H, W = 2, 4, 8, 16, 16

    key = jax.random.PRNGKey(0)
    kx, kw, kb = jax.random.split(key, 3)

    x = jax.random.normal(kx, (N, CIN, H, W), dtype=jnp.float32)

    # deterministic param init (PyTorch-style uniform bounds for the conv)
    fan_in = CIN * KH * KW
    bound = 1.0 / (fan_in ** 0.5)
    weight = jax.random.uniform(kw, (COUT, CIN, KH, KW), jnp.float32, -bound, bound)
    bias = jax.random.uniform(kb, (COUT,), jnp.float32, -bound, bound)
    gamma = jnp.ones((COUT,), jnp.float32)   # BatchNorm2d weight init
    beta = jnp.zeros((COUT,), jnp.float32)   # BatchNorm2d bias init

    out = std_conv(x, weight, bias, gamma, beta, seed=0)
    out = jax.block_until_ready(out)

    assert out.shape == (N, COUT, H, W), out.shape
    assert bool(jnp.all(jnp.isfinite(out)))
    print("KERNEL_OK")
</pallas_src>

<mosaic_0001>
module attributes {stable_mosaic.version = 11 : i64} {
  func.func @stdconv_kernel(%arg0: i32, %arg1: memref<36x512xf32, #tpu.memory_space<vmem>>, %arg2: memref<8x36xf32, #tpu.memory_space<vmem>>, %arg3: memref<8x1xf32, #tpu.memory_space<vmem>>, %arg4: memref<8x1xf32, #tpu.memory_space<vmem>>, %arg5: memref<8x1xf32, #tpu.memory_space<vmem>>, %arg6: memref<8x512xf32, #tpu.memory_space<vmem>>, %arg7: memref<8x512xf32, #tpu.memory_space<vmem>>) attributes {dimension_semantics = [#tpu.dimension_semantics<arbitrary>], iteration_bounds = array<i64: 1>, scalar_prefetch = 0 : i64, scratch_operands = 0 : i64, tpu.core_type = #tpu.core_type<tc>, window_params = [{pipeline_mode = #tpu.pipeline_mode<synchronous>, transform_indices = @transform_0, window_bounds = array<i64: 36, 512>}, {pipeline_mode = #tpu.pipeline_mode<synchronous>, transform_indices = @transform_1, window_bounds = array<i64: 8, 36>}, {pipeline_mode = #tpu.pipeline_mode<synchronous>, transform_indices = @transform_2, window_bounds = array<i64: 8, 1>}, {pipeline_mode = #tpu.pipeline_mode<synchronous>, transform_indices = @transform_3, window_bounds = array<i64: 8, 1>}, {pipeline_mode = #tpu.pipeline_mode<synchronous>, transform_indices = @transform_4, window_bounds = array<i64: 8, 1>}, {pipeline_mode = #tpu.pipeline_mode<synchronous>, transform_indices = @transform_5, window_bounds = array<i64: 8, 512>}, {pipeline_mode = #tpu.pipeline_mode<synchronous>, transform_indices = @transform_6, window_bounds = array<i64: 8, 512>}]} {
    %c0 = arith.constant 0 : index
    %c0_0 = arith.constant 0 : index
    %0 = vector.load %arg2[%c0, %c0_0] : memref<8x36xf32, #tpu.memory_space<vmem>>, vector<8x36xf32>
    %c0_1 = arith.constant 0 : index
    %c0_2 = arith.constant 0 : index
    %1 = vector.load %arg1[%c0_1, %c0_2] : memref<36x512xf32, #tpu.memory_space<vmem>>, vector<36x512xf32>
    %cst = arith.constant dense<0.000000e+00> : vector<8x512xf32>
    %2 = tpu.matmul %0, %1, %cst {dimension_numbers = #tpu.dot_dimension_numbers<[1], [0], [0], [1], [0, 0, 1, 1], [], []>} : vector<8x36xf32>, vector<36x512xf32>, vector<8x512xf32> -> vector<8x512xf32>
    %c0_3 = arith.constant 0 : index
    %c0_4 = arith.constant 0 : index
    %3 = vector.load %arg3[%c0_3, %c0_4] : memref<8x1xf32, #tpu.memory_space<vmem>>, vector<8x1xf32>
    %4 = vector.broadcast %3 : vector<8x1xf32> to vector<8x512xf32>
    %5 = arith.addf %2, %4 : vector<8x512xf32>
    %cst_5 = arith.constant 0.000000e+00 : f32
    %6 = vector.broadcast %cst_5 : f32 to vector<8x512xf32>
    %7 = arith.maximumf %5, %6 : vector<8x512xf32>
    %cst_6 = arith.constant dense<0.000000e+00> : vector<8xf32>
    %8 = vector.multi_reduction <add>, %7, %cst_6 [1] : vector<8x512xf32> to vector<8xf32>
    %9 = vector.shape_cast %8 : vector<8xf32> to vector<8x1xf32>
    %10 = arith.mulf %7, %7 : vector<8x512xf32>
    %cst_7 = arith.constant dense<0.000000e+00> : vector<8xf32>
    %11 = vector.multi_reduction <add>, %10, %cst_7 [1] : vector<8x512xf32> to vector<8xf32>
    %12 = vector.shape_cast %11 : vector<8xf32> to vector<8x1xf32>
    %cst_8 = arith.constant 0.001953125 : f32
    %13 = vector.broadcast %cst_8 : f32 to vector<8x1xf32>
    %14 = arith.mulf %9, %13 : vector<8x1xf32>
    %cst_9 = arith.constant 0.001953125 : f32
    %15 = vector.broadcast %cst_9 : f32 to vector<8x1xf32>
    %16 = arith.mulf %12, %15 : vector<8x1xf32>
    %17 = arith.mulf %14, %14 : vector<8x1xf32>
    %18 = arith.subf %16, %17 : vector<8x1xf32>
    %cst_10 = arith.constant 0.000000e+00 : f32
    %19 = vector.broadcast %cst_10 : f32 to vector<8x1xf32>
    %20 = arith.maximumf %18, %19 : vector<8x1xf32>
    %cst_11 = arith.constant 9.99999974E-6 : f32
    %21 = vector.broadcast %cst_11 : f32 to vector<8x1xf32>
    %22 = arith.addf %20, %21 : vector<8x1xf32>
    %23 = math.rsqrt %22 : vector<8x1xf32>
    %c0_12 = arith.constant 0 : index
    %c0_13 = arith.constant 0 : index
    %24 = vector.load %arg4[%c0_12, %c0_13] : memref<8x1xf32, #tpu.memory_space<vmem>>, vector<8x1xf32>
    %25 = arith.mulf %23, %24 : vector<8x1xf32>
    %c0_14 = arith.constant 0 : index
    %c0_15 = arith.constant 0 : index
    %26 = vector.load %arg5[%c0_14, %c0_15] : memref<8x1xf32, #tpu.memory_space<vmem>>, vector<8x1xf32>
    %27 = arith.mulf %14, %25 : vector<8x1xf32>
    %28 = arith.subf %26, %27 : vector<8x1xf32>
    %29 = vector.broadcast %25 : vector<8x1xf32> to vector<8x512xf32>
    %30 = arith.mulf %7, %29 : vector<8x512xf32>
    %31 = vector.broadcast %28 : vector<8x1xf32> to vector<8x512xf32>
    %32 = arith.addf %30, %31 : vector<8x512xf32>
    %c0_16 = arith.constant 0 : index
    %c0_17 = arith.constant 0 : index
    %33 = vector.load %arg6[%c0_16, %c0_17] : memref<8x512xf32, #tpu.memory_space<vmem>>, vector<8x512xf32>
    %cst_18 = arith.constant 1.000000e-01 : f32
    %34 = vector.broadcast %cst_18 : f32 to vector<8x512xf32>
    %35 = arith.cmpf oge, %33, %34 : vector<8x512xf32>
    %cst_19 = arith.constant 0.000000e+00 : f32
    %36 = vector.broadcast %cst_19 : f32 to vector<8x512xf32>
    %37 = arith.select %35, %32, %36 : vector<8x512xi1>, vector<8x512xf32>
    %c0_20 = arith.constant 0 : index
    %c0_21 = arith.constant 0 : index
    %38 = vector.load %arg7[%c0_20, %c0_21] : memref<8x512xf32, #tpu.memory_space<vmem>>, vector<8x512xf32>
    tpu.vector_store %arg7[%c0_20, %c0_21], %37 {strides = array<i32>} : memref<8x512xf32, #tpu.memory_space<vmem>>, vector<8x512xf32>,
    return
  }
  func.func @transform_0(%arg0: i32) -> (i32, i32) {
    %c0_i32 = arith.constant 0 : i32
    %c0_i32_0 = arith.constant 0 : i32
    %c0_i32_1 = arith.constant 0 : i32
    return %c0_i32, %c0_i32_0 : i32, i32
  }
  func.func @transform_1(%arg0: i32) -> (i32, i32) {
    %c0_i32 = arith.constant 0 : i32
    %c0_i32_0 = arith.constant 0 : i32
    %c0_i32_1 = arith.constant 0 : i32
    return %c0_i32, %c0_i32_0 : i32, i32
  }
  func.func @transform_2(%arg0: i32) -> (i32, i32) {
    %c0_i32 = arith.constant 0 : i32
    %c0_i32_0 = arith.constant 0 : i32
    %c0_i32_1 = arith.constant 0 : i32
    return %c0_i32, %c0_i32_0 : i32, i32
  }
  func.func @transform_3(%arg0: i32) -> (i32, i32) {
    %c0_i32 = arith.constant 0 : i32
    %c0_i32_0 = arith.constant 0 : i32
    %c0_i32_1 = arith.constant 0 : i32
    return %c0_i32, %c0_i32_0 : i32, i32
  }
  func.func @transform_4(%arg0: i32) -> (i32, i32) {
    %c0_i32 = arith.constant 0 : i32
    %c0_i32_0 = arith.constant 0 : i32
    %c0_i32_1 = arith.constant 0 : i32
    return %c0_i32, %c0_i32_0 : i32, i32
  }
  func.func @transform_5(%arg0: i32) -> (i32, i32) {
    %c0_i32 = arith.constant 0 : i32
    %c0_i32_0 = arith.constant 0 : i32
    %c0_i32_1 = arith.constant 0 : i32
    return %c0_i32, %c0_i32_0 : i32, i32
  }
  func.func @transform_6(%arg0: i32) -> (i32, i32) {
    %c0_i32 = arith.constant 0 : i32
    %c0_i32_0 = arith.constant 0 : i32
    %c0_i32_1 = arith.constant 0 : i32
    return %c0_i32, %c0_i32_0 : i32, i32
  }
}

</mosaic_0001>

<llo_original>
// kernel: tpu_custom_call.1
$region0: #{tpu_custom_call.1}
  #allocation0 [shape = 'u32[]', space=smem, size = 0x4, offset = 0x4, fixed_abs, tag = 'smem constant byte address 0x4 - core index']
  #allocation1 [shape = 'u32[72,128]{1,0:T(1,128)}', space=vmem, size = 0x9000, scoped, tag = 'internal scratch']
  %s0 = inlined_call_operand.hbm [shape: f32[36,512], index: 0, kind: input, shape index: {}]
  %s1 = inlined_call_operand.vmem [shape: f32[8,36], index: 1, kind: input, shape index: {}]
  %s2 = inlined_call_operand.vmem [shape: f32[8,1], index: 2, kind: input, shape index: {}]
  %s3 = inlined_call_operand.vmem [shape: f32[8,1], index: 3, kind: input, shape index: {}]
  %s4 = inlined_call_operand.vmem [shape: f32[8,1], index: 4, kind: input, shape index: {}]
  %s5 = inlined_call_operand.hbm [shape: f32[8,512], index: 5, kind: input, shape index: {}]
  %s6 = inlined_call_operand.hbm [shape: f32[8,512], index: 6, kind: output, shape index: {}]
  %s7 = sld [smem:[#allocation0]]
  $region42: #{tpu_custom_call.1} parent=0
    _
  %s9 = ssub.s32 1, %s7
  %s10 = scalar_select 0, %s9, %s7
  $region1: #{tpu_custom_call.1} parent=0
    #allocation2 [shape = 'u8[81920]{0}', space=vmem, size = 0x14000, scoped, tag = 'input window, operand 0, single buffered']
    #allocation3 [shape = 's32[1]{0}', space=sflag, size = 0x4, scoped, tag = 'scoped memory for tpu_custom_call.1']
    #allocation4 [shape = 's32[1]{0}', space=sflag, size = 0x4, scoped, tag = 'scoped memory for tpu_custom_call.1']
    #allocation5 [shape = 'u8[16384]{0}', space=vmem, size = 0x4000, scoped, tag = 'input window, operand 5, single buffered']
    #allocation6 [shape = 's32[1]{0}', space=sflag, size = 0x4, scoped, tag = 'scoped memory for tpu_custom_call.1']
    #allocation7 [shape = 'u8[16384]{0}', space=vmem, size = 0x4000, scoped, tag = 'output window, operand 0, single buffered']
    %11 = vsyncpa [#allocation3], 0
    %12 = vsyncpa [#allocation6], 0
    %13 = vsyncpa [#allocation4], 0
    // Predicated region
    $region2: #{tpu_custom_call.1} parent=1 // pred_check
      _
    $region3: #{tpu_custom_call.1} parent=1 // pred_check_branch
      %15 = sbr.rel (0) target = $region5
    $region4: #{tpu_custom_call.1} parent=1 // pred_region
      %17 = vsyncadd [#allocation3], 0
      %s18 = sshll.u32 %s0, 4
      %s19 = int_to_ptr.hbm [resolvable:$true] %s18
      %s20 = sshll.u32 [#allocation2], 4
      %s21 = int_to_ptr.vmem [resolvable:$true] %s20
      %26 = dma.hbm_to_vmem [thread:$0]  %s19, 2560, %s21, [#allocation3], 512, 512, 32
    $region5: #{tpu_custom_call.1} parent=1 // pred_fallthru
      _
    // Predicated region
    $region6: #{tpu_custom_call.1} parent=1 // pred_check
      _
    $region7: #{tpu_custom_call.1} parent=1 // pred_check_branch
      %28 = sbr.rel (0) target = $region9
    $region8: #{tpu_custom_call.1} parent=1 // pred_region
      _
    $region9: #{tpu_custom_call.1} parent=1 // pred_fallthru
      _
    // Predicated region
    $region10: #{tpu_custom_call.1} parent=1 // pred_check
      _
    $region11: #{tpu_custom_call.1} parent=1 // pred_check_branch
      %30 = sbr.rel (0) target = $region13
    $region12: #{tpu_custom_call.1} parent=1 // pred_region
      _
    $region13: #{tpu_custom_call.1} parent=1 // pred_fallthru
      _
    // Predicated region
    $region14: #{tpu_custom_call.1} parent=1 // pred_check
      _
    $region15: #{tpu_custom_call.1} parent=1 // pred_check_branch
      %32 = sbr.rel (0) target = $region17
    $region16: #{tpu_custom_call.1} parent=1 // pred_region
      _
    $region17: #{tpu_custom_call.1} parent=1 // pred_fallthru
      _
    // Predicated region
    $region18: #{tpu_custom_call.1} parent=1 // pred_check
      _
    $region19: #{tpu_custom_call.1} parent=1 // pred_check_branch
      %34 = sbr.rel (0) target = $region21
    $region20: #{tpu_custom_call.1} parent=1 // pred_region
      _
    $region21: #{tpu_custom_call.1} parent=1 // pred_fallthru
      _
    // Predicated region
    $region22: #{tpu_custom_call.1} parent=1 // pred_check
      _
    $region23: #{tpu_custom_call.1} parent=1 // pred_check_branch
      %36 = sbr.rel (0) target = $region25
    $region24: #{tpu_custom_call.1} parent=1 // pred_region
      %38 = vsyncadd [#allocation6], 0
      %s40 = sshll.u32 %s5, 4
      %s41 = int_to_ptr.hbm [resolvable:$true] %s40
      %s42 = sshll.u32 [#allocation5], 4
      %s43 = int_to_ptr.vmem [resolvable:$true] %s42
      %45 = dma.hbm_to_vmem [thread:$0]  %s41, 512, %s43, [#allocation6]
    $region25: #{tpu_custom_call.1} parent=1 // pred_fallthru
      _
    // Predicated region
    $region26: #{tpu_custom_call.1} parent=1 // pred_check
      _
    $region27: #{tpu_custom_call.1} parent=1 // pred_check_branch
      %47 = sbr.rel (0) target = $region29
    $region28: #{tpu_custom_call.1} parent=1 // pred_region
      %49 = dma.done [#allocation3], 2560
    $region29: #{tpu_custom_call.1} parent=1 // pred_fallthru
      _
    // Predicated region
    $region30: #{tpu_custom_call.1} parent=1 // pred_check
      _
    $region31: #{tpu_custom_call.1} parent=1 // pred_check_branch
      %51 = sbr.rel (0) target = $region33
    $region32: #{tpu_custom_call.1} parent=1 // pred_region
      %53 = dma.done [#allocation6], 512
    $region33: #{tpu_custom_call.1} parent=1 // pred_fallthru
      _
    %v54 = vld [vmem:[%s1] sm:$0xff]
    %v55 = vld [vmem:[#allocation2] sm:$0xff]
    %v56 = vld [vmem:[#allocation2 + $0x8] sm:$0xff]
    %v57 = vld [vmem:[#allocation2 + $0x10] sm:$0xff]
    %v58 = vld [vmem:[#allocation2 + $0x18] sm:$0xff]
    %v59 = vld [vmem:[#allocation2 + $0x20] sm:$0xff]
    %v60 = vld [vmem:[#allocation2 + $0x28] sm:$0xff]
    %v61 = vld [vmem:[#allocation2 + $0x30] sm:$0xff]
    %v62 = vld [vmem:[#allocation2 + $0x38] sm:$0xff]
    %v63 = vld [vmem:[#allocation2 + $0x40] sm:$0xff]
    %v64 = vld [vmem:[#allocation2 + $0x48] sm:$0xff]
    %v65 = vld [vmem:[#allocation2 + $0x50] sm:$0xff]
    %v66 = vld [vmem:[#allocation2 + $0x58] sm:$0xff]
    %v67 = vld [vmem:[#allocation2 + $0x60] sm:$0xff]
    %v68 = vld [vmem:[#allocation2 + $0x68] sm:$0xff]
    %v69 = vld [vmem:[#allocation2 + $0x70] sm:$0xff]
    %v70 = vld [vmem:[#allocation2 + $0x78] sm:$0xff]
    %v71 = vld [vmem:[#allocation2 + $0x80] sm:$0xf]
    %v72 = vld [vmem:[#allocation2 + $0x88] sm:$0xf]
    %v73 = vld [vmem:[#allocation2 + $0x90] sm:$0xf]
    %v74 = vld [vmem:[#allocation2 + $0x98] sm:$0xf]
    %v75 = vld [vmem:[%s2] sm:$0xff]
    %77 = vset.pattern.permute.xlu0 0
    %78 = vperm.xlu0 %77, %v75
    %v79 = vpop.permute.xlu0 %78
    %vm81 = vcmask 293888
    %v83 = vsel %vm81, %v54, 0
    %vm85 = vcmask 1043456
    %v87 = vsel %vm85, %v71, 0
    %v90 = vsel %vm85, %v72, 0
    %v93 = vsel %vm85, %v73, 0
    %v96 = vsel %vm85, %v74, 0
    %98 = vmatpush.msra.mxu0 0.0
    %99 = vmatpush.msra.mxu0 0.0
    %100 = vmatpush.msra.mxu0 0.0
    %101 = vmatpush.msra.mxu0 0.0
    %102 = vmatpush.msra.mxu0 0.0
    %103 = vmatpush.msra.mxu0 0.0
    %104 = vmatpush.msra.mxu0 0.0
    %105 = vmatpush.msra.mxu0 0.0
    %106 = vmatpush.msra.mxu0 0.0
    %107 = vmatpush.msra.mxu0 0.0
    %108 = vmatpush.msra.mxu0 0.0
    %109 = vmatpush.msra.mxu0 %v87
    %110 = vmatpush.msra.mxu0 %v67
    %111 = vmatpush.msra.mxu0 %v63
    %112 = vmatpush.msra.mxu0 %v59
    %113 = vmatpush.msra.mxu0 %v55
    %114 = vmatmul.f32.gmra.mxu0 %v83
    %v115 = vpop.f32.mrf.mxu0
    %v116 = vadd.f32 %v79, %v115
    %117 = vdwg.mxu0
    %118 = vmatpush.msra.mxu0 0.0
    %119 = vmatpush.msra.mxu0 0.0
    %120 = vmatpush.msra.mxu0 0.0
    %121 = vmatpush.msra.mxu0 0.0
    %122 = vmatpush.msra.mxu0 0.0
    %123 = vmatpush.msra.mxu0 0.0
    %124 = vmatpush.msra.mxu0 0.0
    %125 = vmatpush.msra.mxu0 0.0
    %126 = vmatpush.msra.mxu0 0.0
    %127 = vmatpush.msra.mxu0 0.0
    %128 = vmatpush.msra.mxu0 0.0
    %129 = vmatpush.msra.mxu0 %v90
    %130 = vmatpush.msra.mxu0 %v68
    %131 = vmatpush.msra.mxu0 %v64
    %132 = vmatpush.msra.mxu0 %v60
    %133 = vmatpush.msra.mxu0 %v56
    %134 = vmatmul.f32.gmra.mxu0 %v83
    %v135 = vpop.f32.mrf.mxu0
    %v136 = vadd.f32 %v79, %v135
    %137 = vdwg.mxu0
    %138 = vmatpush.msra.mxu0 0.0
    %139 = vmatpush.msra.mxu0 0.0
    %140 = vmatpush.msra.mxu0 0.0
    %141 = vmatpush.msra.mxu0 0.0
    %142 = vmatpush.msra.mxu0 0.0
    %143 = vmatpush.msra.mxu0 0.0
    %144 = vmatpush.msra.mxu0 0.0
    %145 = vmatpush.msra.mxu0 0.0
    %146 = vmatpush.msra.mxu0 0.0
    %147 = vmatpush.msra.mxu0 0.0
    %148 = vmatpush.msra.mxu0 0.0
    %149 = vmatpush.msra.mxu0 %v93
    %150 = vmatpush.msra.mxu0 %v69
    %151 = vmatpush.msra.mxu0 %v65
    %152 = vmatpush.msra.mxu0 %v61
    %153 = vmatpush.msra.mxu0 %v57
    %154 = vmatmul.f32.gmra.mxu0 %v83
    %v155 = vpop.f32.mrf.mxu0
    %v156 = vadd.f32 %v79, %v155
    %157 = vdwg.mxu0
    %158 = vmatpush.msra.mxu0 0.0
    %159 = vmatpush.msra.mxu0 0.0
    %160 = vmatpush.msra.mxu0 0.0
    %161 = vmatpush.msra.mxu0 0.0
    %162 = vmatpush.msra.mxu0 0.0
    %163 = vmatpush.msra.mxu0 0.0
    %164 = vmatpush.msra.mxu0 0.0
    %165 = vmatpush.msra.mxu0 0.0
    %166 = vmatpush.msra.mxu0 0.0
    %167 = vmatpush.msra.mxu0 0.0
    %168 = vmatpush.msra.mxu0 0.0
    %169 = vmatpush.msra.mxu0 %v96
    %170 = vmatpush.msra.mxu0 %v70
    %171 = vmatpush.msra.mxu0 %v66
    %172 = vmatpush.msra.mxu0 %v62
    %173 = vmatpush.msra.mxu0 %v58
    %174 = vmatmul.f32.gmra.mxu0 %v83
    %v175 = vpop.f32.mrf.mxu0
    %v176 = vadd.f32 %v79, %v175
    %177 = vdwg.mxu0
    %v178 = vmax.f32 %v116, 0.0
    %v179 = vmax.f32 %v136, 0.0
    %v180 = vmax.f32 %v156, 0.0
    %v181 = vmax.f32 %v176, 0.0
    %v182 = vadd.f32 %v178, %v179
    %v183 = vadd.f32 %v182, %v180
    %v184 = vadd.f32 %v183, %v181
    %185 = vadd.xlane.f32.xlu0 %v184
    %v186 = vpop.xlane.xlu0 %185
    %v187 = vmul.f32 %v178, %v178
    %v188 = vmul.f32 %v179, %v179
    %v189 = vmul.f32 %v180, %v180
    %v190 = vmul.f32 %v181, %v181
    %v191 = vadd.f32 %v187, %v188
    %v192 = vadd.f32 %v191, %v189
    %v193 = vadd.f32 %v192, %v190
    %194 = vadd.xlane.f32.xlu0 %v193
    %v195 = vpop.xlane.xlu0 %194
    %v196 = vmul.f32 %v186, 0.001953125
    %v197 = vmul.f32 %v195, 0.001953125
    %v198 = vmul.f32 %v196, %v196
    %v199 = vsub.f32 %v197, %v198
    %v200 = vmax.f32 %v199, 0.0
    %v201 = vadd.f32 %v200, 1e-05
    %v202 = vrsqrt.pop %v201
    %v203 = vmul.f32 %v202, %v201
    %v204 = vmul.f32 %v203, %v202
    %v205 = vmul.f32 0.5, %v204
    %v206 = vsub.f32 1.5, %v205
    %v207 = vmul.f32 %v202, %v206
    %vm208 = vweird.f32 %v201
    %vm209 = vweird.f32 %v202
    %vm210 = vmor %vm208, %vm209
    %v211 = vsel %vm210, %v202, %v207
    %v212 = vld [vmem:[%s3] sm:$0xff]
    %v213 = vmul.f32 %v211, %v212
    %v214 = vld [vmem:[%s4] sm:$0xff]
    %v215 = vmul.f32 %v196, %v213
    %v216 = vsub.f32 %v214, %v215
    %218 = vset.pattern.permute.xlu0 0
    %219 = vperm.xlu0 %218, %v213
    %v220 = vpop.permute.xlu0 %219
    %v222 = vmul.f32 %v178, %v220
    %v223 = vmul.f32 %v179, %v220
    %v224 = vmul.f32 %v180, %v220
    %v225 = vmul.f32 %v181, %v220
    %227 = vset.pattern.permute.xlu0 0
    %228 = vperm.xlu0 %227, %v216
    %v229 = vpop.permute.xlu0 %228
    %v231 = vadd.f32 %v222, %v229
    %v232 = vadd.f32 %v223, %v229
    %v233 = vadd.f32 %v224, %v229
    %v234 = vadd.f32 %v225, %v229
    %v235 = vld [vmem:[#allocation5] sm:$0xff]
    %v236 = vld [vmem:[#allocation5 + $0x8] sm:$0xff]
    %v237 = vld [vmem:[#allocation5 + $0x10] sm:$0xff]
    %v238 = vld [vmem:[#allocation5 + $0x18] sm:$0xff]
    %vm239 = vcmp.ge.f32.partialorder %v235, 0.1
    %vm240 = vcmp.ge.f32.partialorder %v236, 0.1
    %vm241 = vcmp.ge.f32.partialorder %v237, 0.1
    %vm242 = vcmp.ge.f32.partialorder %v238, 0.1
    %v243 = vsel %vm239, %v231, 0.0
    %v244 = vsel %vm240, %v232, 0.0
    %v245 = vsel %vm241, %v233, 0.0
    %v246 = vsel %vm242, %v234, 0.0
    %247 = vst [vmem:[#allocation7] sm:$0xff] %v243
    %248 = vst [vmem:[#allocation7 + $0x8] sm:$0xff] %v244
    %249 = vst [vmem:[#allocation7 + $0x10] sm:$0xff] %v245
    %250 = vst [vmem:[#allocation7 + $0x18] sm:$0xff] %v246
    // Predicated region
    $region34: #{tpu_custom_call.1} parent=1 // pred_check
      _
    $region35: #{tpu_custom_call.1} parent=1 // pred_check_branch
      %252 = sbr.rel (0) target = $region37
    $region36: #{tpu_custom_call.1} parent=1 // pred_region
      %254 = vsyncadd [#allocation4], 0
      %s256 = sshll.u32 [#allocation7], 4
      %s257 = int_to_ptr.vmem [resolvable:$true] %s256
      %s258 = sshll.u32 %s6, 4
      %s259 = int_to_ptr.hbm [resolvable:$true] %s258
      %261 = dma.vmem_to_hbm [thread:$0]  %s257, 512, %s259, [#allocation4]
    $region37: #{tpu_custom_call.1} parent=1 // pred_fallthru
      _
    // Predicated region
    $region38: #{tpu_custom_call.1} parent=1 // pred_check
      _
    $region39: #{tpu_custom_call.1} parent=1 // pred_check_branch
      %263 = sbr.rel (0) target = $region41
    $region40: #{tpu_custom_call.1} parent=1 // pred_region
      %265 = dma.done [#allocation4], 512
    $region41: #{tpu_custom_call.1} parent=1 // pred_fallthru
      _
    %266 = vsyncpa [#allocation3], 1
    %267 = vsyncpa [#allocation6], 1
    %268 = vsyncpa [#allocation4], 1

</llo_original>
